<compile_context>
chip_gen: v7x
topology: tpu7x:2x2x1
jax: 0.10.0
libtpu: 0.0.40
codegen_flags: <defaults>
</compile_context>

<pallas_src>
import jax
import jax.numpy as jnp
from jax.experimental import pallas as pl
from jax.experimental.pallas import tpu as pltpu


def dan_kernel(ids_ref, labels_ref, embed_ref, wh_ref, bh_ref, wo_ref, bo_ref,
               probas_ref, bce_ref):
    TB, L = ids_ref.shape          # batch tile, tokens per sentence
    V, H = embed_ref.shape         # vocab, hidden

    ids = ids_ref[...]                                            # [TB, L] int32

    # --- fused embedding gather + mean pooling ------------------------------
    # Bag-of-words counts (exact int32 accumulation, converted once), then a
    # single [TB,V] x [V,H] bf16 MXU matmul with f32 accumulation.
    viota = jax.lax.broadcasted_iota(jnp.int32, (TB, V), 1)       # [TB, V]
    counts = jnp.zeros((TB, V), jnp.int32)
    for l in range(L):             # L is small & static -> unrolled VPU adds
        counts = counts + (ids[:, l:l + 1] == viota).astype(jnp.int32)

    # counts <= L are exactly representable in bf16 (two-step cast: i32->f32->bf16).
    counts_bf16 = counts.astype(jnp.float32).astype(jnp.bfloat16)
    pooled = jnp.dot(counts_bf16, embed_ref[...],
                     preferred_element_type=jnp.float32)          # [TB, H] f32
    pooled = pooled * (1.0 / L)    # mean-pool scale folded in post-matmul (TB*H muls)

    # --- hidden layer: tanh(x @ Wh^T + bh), bf16 MXU / f32 accumulate --------
    hid = jnp.tanh(jnp.dot(pooled.astype(jnp.bfloat16), wh_ref[...],
                           preferred_element_type=jnp.float32)
                   + bh_ref[...])                                 # [TB, H] f32

    # --- output layer: 1-row NT matmul -> lane-dense [1, TB] scores ----------
    scores = jax.lax.dot_general(
        wo_ref[...], hid,
        dimension_numbers=(((1,), (1,)), ((), ())),
        preferred_element_type=jnp.float32) + bo_ref[0, 0]        # [1, TB]

    # Sigmoid: divide replaced by an EUP approximate reciprocal (free slot).
    probas_ref[...] = pl.reciprocal(1.0 + jnp.exp(-scores), approx=True)

    # --- numerically stable BCE from logits (per-sample; summed in wrapper) --
    y = labels_ref[...]                                           # [1, TB]
    bce_ref[...] = (jnp.maximum(scores, 0.0) - y * scores
                    + jnp.log(1.0 + jnp.exp(-jnp.abs(scores))))


def dan_forward(token_ids, labels, embed, w_hid, b_hid, w_out, b_out, *,
                tile_b=None):
    """token_ids: [B, L] int32; labels: [B] float32.
    embed: [V, H]; w_hid: [H, H] (PyTorch [out, in]); b_hid: [H];
    w_out: [1, H]; b_out: [1]."""
    B, L = token_ids.shape
    V, H = embed.shape

    if tile_b is None:
        # Fill MXU rows on large batches; collapse small batches to one step.
        tile_b = 256 if B >= 256 else max(8, ((B + 7) // 8) * 8)
    G = pl.cdiv(B, tile_b)
    B_pad = G * tile_b

    # Pad batch to a multiple of the tile (padded rows are dropped afterwards).
    ids = jnp.zeros((B_pad, L), jnp.int32).at[:B].set(token_ids.astype(jnp.int32))
    y = (jnp.zeros((B_pad,), jnp.float32).at[:B]
         .set(labels.astype(jnp.float32)).reshape(G, tile_b))     # lane-dense labels

    embed_bf = embed.astype(jnp.bfloat16)                         # [V, H]  bf16 MXU operand
    wh_t = jnp.transpose(w_hid).astype(jnp.bfloat16)              # [in, out] = [H, H]
    bh = b_hid.reshape(1, H).astype(jnp.float32)
    wo = w_out.reshape(1, H).astype(jnp.float32)
    bo = b_out.reshape(1, 1).astype(jnp.float32)                  # SMEM scalar

    cost = pl.CostEstimate(
        flops=2 * B_pad * (V * H + H * H + H),
        transcendentals=B_pad * (H + 4),
        bytes_accessed=(ids.size * 4 + y.size * 4 + embed_bf.size * 2
                        + wh_t.size * 2 + bh.size * 4 + wo.size * 4 + 4
                        + 2 * B_pad * 4),
    )

    probas, bce = pl.pallas_call(
        dan_kernel,
        grid=(G,),
        out_shape=(
            jax.ShapeDtypeStruct((G, tile_b), jnp.float32),   # probas (lane-dense)
            jax.ShapeDtypeStruct((G, tile_b), jnp.float32),   # per-sample BCE
        ),
        in_specs=[
            pl.BlockSpec((tile_b, L), lambda i: (i, 0)),      # token ids (lane-dense L)
            pl.BlockSpec((1, tile_b), lambda i: (i, 0)),      # labels (lane-dense)
            pl.BlockSpec((V, H), lambda i: (0, 0)),           # embedding table (bf16)
            pl.BlockSpec((H, H), lambda i: (0, 0)),           # hidden weight (bf16, pre-T)
            pl.BlockSpec((1, H), lambda i: (0, 0)),           # hidden bias (f32)
            pl.BlockSpec((1, H), lambda i: (0, 0)),           # output weight row (f32)
            pl.BlockSpec(memory_space=pltpu.MemorySpace.SMEM),  # output bias scalar
        ],
        out_specs=(
            pl.BlockSpec((1, tile_b), lambda i: (i, 0)),
            pl.BlockSpec((1, tile_b), lambda i: (i, 0)),
        ),
        compiler_params=pltpu.CompilerParams(
            dimension_semantics=("parallel",),                # megacore on v7x
            vmem_limit_bytes=32 * 1024 * 1024),
        cost_estimate=cost,
    )(ids, y, embed_bf, wh_t, bh, wo, bo)

    # Tiny cross-tile reduction kept outside the kernel so the batch grid axis
    # stays fully parallel across TensorCores.
    loss = jnp.sum(bce.reshape(-1)[:B])
    return loss, probas.reshape(-1)[:B]


if __name__ == "__main__":
    # Small, DAN-consistent shapes (lane-aligned V/H; single batch tile).
    B, L, V, H = 16, 16, 128, 128

    key = jax.random.PRNGKey(0)
    k_ids, k_lab, k_emb, k_wh, k_bh, k_wo, k_bo = jax.random.split(key, 7)

    token_ids = jax.random.randint(k_ids, (B, L), 0, V, dtype=jnp.int32)
    labels = jax.random.bernoulli(k_lab, 0.5, (B,)).astype(jnp.float32)

    # Deterministic synthetic parameters (shapes per nn.Embedding / nn.Linear).
    embed = jax.random.normal(k_emb, (V, H), jnp.float32) * 0.1
    w_hid = jax.random.normal(k_wh, (H, H), jnp.float32) * 0.1    # [out, in]
    b_hid = jax.random.normal(k_bh, (H,), jnp.float32) * 0.1
    w_out = jax.random.normal(k_wo, (1, H), jnp.float32) * 0.1    # [out, in]
    b_out = jax.random.normal(k_bo, (1,), jnp.float32) * 0.1

    loss, probas = dan_forward(token_ids, labels, embed, w_hid, b_hid,
                               w_out, b_out)
    jax.block_until_ready((loss, probas))

    # Pure-JAX f32 reference of the same forward.
    emb_ref = jnp.take(embed, token_ids, axis=0).mean(axis=1)     # [B, H]
    hid_ref = jnp.tanh(emb_ref @ w_hid.T + b_hid)
    p_ref = jax.nn.sigmoid(hid_ref @ w_out.T + b_out)[:, 0]
    loss_ref = -jnp.sum(labels * jnp.log(p_ref) + (1 - labels) * jnp.log(1 - p_ref))

    # Tolerances cover bf16 weight rounding (f32 accumulation) and the EUP
    # approximate reciprocal used for the sigmoid.
    assert jnp.allclose(probas, p_ref, atol=5e-3), (probas, p_ref)
    assert jnp.allclose(loss, loss_ref, rtol=2e-3, atol=1e-3), (loss, loss_ref)

    print("KERNEL_OK")
</pallas_src>

<mosaic_0001>
module attributes {stable_mosaic.version = 11 : i64} {
  func.func @dan_kernel(%arg0: i32, %arg1: memref<16x16xi32, #tpu.memory_space<vmem>>, %arg2: memref<1x16xf32, #tpu.memory_space<vmem>>, %arg3: memref<128x128xbf16, #tpu.memory_space<vmem>>, %arg4: memref<128x128xbf16, #tpu.memory_space<vmem>>, %arg5: memref<1x128xf32, #tpu.memory_space<vmem>>, %arg6: memref<1x128xf32, #tpu.memory_space<vmem>>, %arg7: memref<1x1xf32, #tpu.memory_space<smem>>, %arg8: memref<1x16xf32, #tpu.memory_space<vmem>>, %arg9: memref<1x16xf32, #tpu.memory_space<vmem>>) attributes {dimension_semantics = [#tpu.dimension_semantics<parallel>], iteration_bounds = array<i64: 1>, scalar_prefetch = 0 : i64, scratch_operands = 0 : i64, tpu.core_type = #tpu.core_type<tc>, window_params = [{transform_indices = @transform_0, window_bounds = array<i64: 16, 16>}, {transform_indices = @transform_1, window_bounds = array<i64: 1, 16>}, {pipeline_mode = #tpu.pipeline_mode<synchronous>, transform_indices = @transform_2, window_bounds = array<i64: 128, 128>}, {pipeline_mode = #tpu.pipeline_mode<synchronous>, transform_indices = @transform_3, window_bounds = array<i64: 128, 128>}, {pipeline_mode = #tpu.pipeline_mode<synchronous>, transform_indices = @transform_4, window_bounds = array<i64: 1, 128>}, {pipeline_mode = #tpu.pipeline_mode<synchronous>, transform_indices = @transform_5, window_bounds = array<i64: 1, 128>}, {transform_indices = @transform_6, window_bounds = array<i64: 1, 1>}, {transform_indices = @transform_7, window_bounds = array<i64: 1, 16>}, {transform_indices = @transform_8, window_bounds = array<i64: 1, 16>}]} {
    %c0 = arith.constant 0 : index
    %c0_0 = arith.constant 0 : index
    %0 = vector.load %arg1[%c0, %c0_0] : memref<16x16xi32, #tpu.memory_space<vmem>>, vector<16x16xi32>
    %1 = tpu.iota {dimensions = array<i32: 1>} : vector<16x128xi32>
    %c0_i32 = arith.constant 0 : i32
    %2 = vector.broadcast %c0_i32 : i32 to vector<16x128xi32>
    %3 = vector.extract_strided_slice %0 {offsets = [0, 0], sizes = [16, 1], strides = [1, 1]} : vector<16x16xi32> to vector<16x1xi32>
    %4 = vector.broadcast %3 : vector<16x1xi32> to vector<16x128xi32>
    %5 = arith.cmpi eq, %4, %1 : vector<16x128xi32>
    %6 = arith.extui %5 : vector<16x128xi1> to vector<16x128xi32>
    %7 = arith.addi %2, %6 : vector<16x128xi32>
    %8 = vector.extract_strided_slice %0 {offsets = [0, 1], sizes = [16, 1], strides = [1, 1]} : vector<16x16xi32> to vector<16x1xi32>
    %9 = vector.broadcast %8 : vector<16x1xi32> to vector<16x128xi32>
    %10 = arith.cmpi eq, %9, %1 : vector<16x128xi32>
    %11 = arith.extui %10 : vector<16x128xi1> to vector<16x128xi32>
    %12 = arith.addi %7, %11 : vector<16x128xi32>
    %13 = vector.extract_strided_slice %0 {offsets = [0, 2], sizes = [16, 1], strides = [1, 1]} : vector<16x16xi32> to vector<16x1xi32>
    %14 = vector.broadcast %13 : vector<16x1xi32> to vector<16x128xi32>
    %15 = arith.cmpi eq, %14, %1 : vector<16x128xi32>
    %16 = arith.extui %15 : vector<16x128xi1> to vector<16x128xi32>
    %17 = arith.addi %12, %16 : vector<16x128xi32>
    %18 = vector.extract_strided_slice %0 {offsets = [0, 3], sizes = [16, 1], strides = [1, 1]} : vector<16x16xi32> to vector<16x1xi32>
    %19 = vector.broadcast %18 : vector<16x1xi32> to vector<16x128xi32>
    %20 = arith.cmpi eq, %19, %1 : vector<16x128xi32>
    %21 = arith.extui %20 : vector<16x128xi1> to vector<16x128xi32>
    %22 = arith.addi %17, %21 : vector<16x128xi32>
    %23 = vector.extract_strided_slice %0 {offsets = [0, 4], sizes = [16, 1], strides = [1, 1]} : vector<16x16xi32> to vector<16x1xi32>
    %24 = vector.broadcast %23 : vector<16x1xi32> to vector<16x128xi32>
    %25 = arith.cmpi eq, %24, %1 : vector<16x128xi32>
    %26 = arith.extui %25 : vector<16x128xi1> to vector<16x128xi32>
    %27 = arith.addi %22, %26 : vector<16x128xi32>
    %28 = vector.extract_strided_slice %0 {offsets = [0, 5], sizes = [16, 1], strides = [1, 1]} : vector<16x16xi32> to vector<16x1xi32>
    %29 = vector.broadcast %28 : vector<16x1xi32> to vector<16x128xi32>
    %30 = arith.cmpi eq, %29, %1 : vector<16x128xi32>
    %31 = arith.extui %30 : vector<16x128xi1> to vector<16x128xi32>
    %32 = arith.addi %27, %31 : vector<16x128xi32>
    %33 = vector.extract_strided_slice %0 {offsets = [0, 6], sizes = [16, 1], strides = [1, 1]} : vector<16x16xi32> to vector<16x1xi32>
    %34 = vector.broadcast %33 : vector<16x1xi32> to vector<16x128xi32>
    %35 = arith.cmpi eq, %34, %1 : vector<16x128xi32>
    %36 = arith.extui %35 : vector<16x128xi1> to vector<16x128xi32>
    %37 = arith.addi %32, %36 : vector<16x128xi32>
    %38 = vector.extract_strided_slice %0 {offsets = [0, 7], sizes = [16, 1], strides = [1, 1]} : vector<16x16xi32> to vector<16x1xi32>
    %39 = vector.broadcast %38 : vector<16x1xi32> to vector<16x128xi32>
    %40 = arith.cmpi eq, %39, %1 : vector<16x128xi32>
    %41 = arith.extui %40 : vector<16x128xi1> to vector<16x128xi32>
    %42 = arith.addi %37, %41 : vector<16x128xi32>
    %43 = vector.extract_strided_slice %0 {offsets = [0, 8], sizes = [16, 1], strides = [1, 1]} : vector<16x16xi32> to vector<16x1xi32>
    %44 = vector.broadcast %43 : vector<16x1xi32> to vector<16x128xi32>
    %45 = arith.cmpi eq, %44, %1 : vector<16x128xi32>
    %46 = arith.extui %45 : vector<16x128xi1> to vector<16x128xi32>
    %47 = arith.addi %42, %46 : vector<16x128xi32>
    %48 = vector.extract_strided_slice %0 {offsets = [0, 9], sizes = [16, 1], strides = [1, 1]} : vector<16x16xi32> to vector<16x1xi32>
    %49 = vector.broadcast %48 : vector<16x1xi32> to vector<16x128xi32>
    %50 = arith.cmpi eq, %49, %1 : vector<16x128xi32>
    %51 = arith.extui %50 : vector<16x128xi1> to vector<16x128xi32>
    %52 = arith.addi %47, %51 : vector<16x128xi32>
    %53 = vector.extract_strided_slice %0 {offsets = [0, 10], sizes = [16, 1], strides = [1, 1]} : vector<16x16xi32> to vector<16x1xi32>
    %54 = vector.broadcast %53 : vector<16x1xi32> to vector<16x128xi32>
    %55 = arith.cmpi eq, %54, %1 : vector<16x128xi32>
    %56 = arith.extui %55 : vector<16x128xi1> to vector<16x128xi32>
    %57 = arith.addi %52, %56 : vector<16x128xi32>
    %58 = vector.extract_strided_slice %0 {offsets = [0, 11], sizes = [16, 1], strides = [1, 1]} : vector<16x16xi32> to vector<16x1xi32>
    %59 = vector.broadcast %58 : vector<16x1xi32> to vector<16x128xi32>
    %60 = arith.cmpi eq, %59, %1 : vector<16x128xi32>
    %61 = arith.extui %60 : vector<16x128xi1> to vector<16x128xi32>
    %62 = arith.addi %57, %61 : vector<16x128xi32>
    %63 = vector.extract_strided_slice %0 {offsets = [0, 12], sizes = [16, 1], strides = [1, 1]} : vector<16x16xi32> to vector<16x1xi32>
    %64 = vector.broadcast %63 : vector<16x1xi32> to vector<16x128xi32>
    %65 = arith.cmpi eq, %64, %1 : vector<16x128xi32>
    %66 = arith.extui %65 : vector<16x128xi1> to vector<16x128xi32>
    %67 = arith.addi %62, %66 : vector<16x128xi32>
    %68 = vector.extract_strided_slice %0 {offsets = [0, 13], sizes = [16, 1], strides = [1, 1]} : vector<16x16xi32> to vector<16x1xi32>
    %69 = vector.broadcast %68 : vector<16x1xi32> to vector<16x128xi32>
    %70 = arith.cmpi eq, %69, %1 : vector<16x128xi32>
    %71 = arith.extui %70 : vector<16x128xi1> to vector<16x128xi32>
    %72 = arith.addi %67, %71 : vector<16x128xi32>
    %73 = vector.extract_strided_slice %0 {offsets = [0, 14], sizes = [16, 1], strides = [1, 1]} : vector<16x16xi32> to vector<16x1xi32>
    %74 = vector.broadcast %73 : vector<16x1xi32> to vector<16x128xi32>
    %75 = arith.cmpi eq, %74, %1 : vector<16x128xi32>
    %76 = arith.extui %75 : vector<16x128xi1> to vector<16x128xi32>
    %77 = arith.addi %72, %76 : vector<16x128xi32>
    %78 = vector.extract_strided_slice %0 {offsets = [0, 15], sizes = [16, 1], strides = [1, 1]} : vector<16x16xi32> to vector<16x1xi32>
    %79 = vector.broadcast %78 : vector<16x1xi32> to vector<16x128xi32>
    %80 = arith.cmpi eq, %79, %1 : vector<16x128xi32>
    %81 = arith.extui %80 : vector<16x128xi1> to vector<16x128xi32>
    %82 = arith.addi %77, %81 : vector<16x128xi32>
    %83 = arith.sitofp %82 : vector<16x128xi32> to vector<16x128xf32>
    %84 = arith.truncf %83 : vector<16x128xf32> to vector<16x128xbf16>
    %c0_1 = arith.constant 0 : index
    %c0_2 = arith.constant 0 : index
    %85 = vector.load %arg3[%c0_1, %c0_2] : memref<128x128xbf16, #tpu.memory_space<vmem>>, vector<128x128xbf16>
    %cst = arith.constant dense<0.000000e+00> : vector<16x128xf32>
    %86 = tpu.matmul %84, %85, %cst {dimension_numbers = #tpu.dot_dimension_numbers<[1], [0], [0], [1], [0, 0, 1, 1], [], []>} : vector<16x128xbf16>, vector<128x128xbf16>, vector<16x128xf32> -> vector<16x128xf32>
    %cst_3 = arith.constant 6.250000e-02 : f32
    %87 = vector.broadcast %cst_3 : f32 to vector<16x128xf32>
    %88 = arith.mulf %86, %87 : vector<16x128xf32>
    %89 = arith.truncf %88 : vector<16x128xf32> to vector<16x128xbf16>
    %c0_4 = arith.constant 0 : index
    %c0_5 = arith.constant 0 : index
    %90 = vector.load %arg4[%c0_4, %c0_5] : memref<128x128xbf16, #tpu.memory_space<vmem>>, vector<128x128xbf16>
    %cst_6 = arith.constant dense<0.000000e+00> : vector<16x128xf32>
    %91 = tpu.matmul %89, %90, %cst_6 {dimension_numbers = #tpu.dot_dimension_numbers<[1], [0], [0], [1], [0, 0, 1, 1], [], []>} : vector<16x128xbf16>, vector<128x128xbf16>, vector<16x128xf32> -> vector<16x128xf32>
    %c0_7 = arith.constant 0 : index
    %c0_8 = arith.constant 0 : index
    %92 = vector.load %arg5[%c0_7, %c0_8] : memref<1x128xf32, #tpu.memory_space<vmem>>, vector<1x128xf32>
    %93 = vector.broadcast %92 : vector<1x128xf32> to vector<16x128xf32>
    %94 = arith.addf %91, %93 : vector<16x128xf32>
    %95 = math.tanh %94 : vector<16x128xf32>
    %c0_9 = arith.constant 0 : index
    %c0_10 = arith.constant 0 : index
    %96 = vector.load %arg6[%c0_9, %c0_10] : memref<1x128xf32, #tpu.memory_space<vmem>>, vector<1x128xf32>
    %cst_11 = arith.constant dense<0.000000e+00> : vector<1x16xf32>
    %97 = tpu.matmul %96, %95, %cst_11 {dimension_numbers = #tpu.dot_dimension_numbers<[1], [1], [0], [0], [0, 0, 1, 0], [], []>} : vector<1x128xf32>, vector<16x128xf32>, vector<1x16xf32> -> vector<1x16xf32>
    %c0_12 = arith.constant 0 : index
    %c0_13 = arith.constant 0 : index
    %98 = memref.load %arg7[%c0_12, %c0_13] : memref<1x1xf32, #tpu.memory_space<smem>>
    %99 = vector.broadcast %98 : f32 to vector<1x16xf32>
    %100 = arith.addf %97, %99 : vector<1x16xf32>
    %cst_14 = arith.constant 0.000000e+00 : f32
    %101 = vector.broadcast %cst_14 : f32 to vector<1x16xf32>
    %102 = arith.subf %101, %100 : vector<1x16xf32>
    %103 = math.exp %102 : vector<1x16xf32>
    %cst_15 = arith.constant 1.000000e+00 : f32
    %104 = vector.broadcast %cst_15 : f32 to vector<1x16xf32>
    %105 = arith.addf %104, %103 : vector<1x16xf32>
    %106 = tpu.reciprocal %105 {approx = true} : vector<1x16xf32> -> vector<1x16xf32>
    %c0_16 = arith.constant 0 : index
    %c0_17 = arith.constant 0 : index
    %107 = vector.load %arg8[%c0_16, %c0_17] : memref<1x16xf32, #tpu.memory_space<vmem>>, vector<1x16xf32>
    tpu.vector_store %arg8[%c0_16, %c0_17], %106 {strides = array<i32>} : memref<1x16xf32, #tpu.memory_space<vmem>>, vector<1x16xf32>,
    %c0_18 = arith.constant 0 : index
    %c0_19 = arith.constant 0 : index
    %108 = vector.load %arg2[%c0_18, %c0_19] : memref<1x16xf32, #tpu.memory_space<vmem>>, vector<1x16xf32>
    %cst_20 = arith.constant 0.000000e+00 : f32
    %109 = vector.broadcast %cst_20 : f32 to vector<1x16xf32>
    %110 = arith.maximumf %100, %109 : vector<1x16xf32>
    %111 = arith.mulf %108, %100 : vector<1x16xf32>
    %112 = arith.subf %110, %111 : vector<1x16xf32>
    %113 = math.absf %100 : vector<1x16xf32>
    %cst_21 = arith.constant 0.000000e+00 : f32
    %114 = vector.broadcast %cst_21 : f32 to vector<1x16xf32>
    %115 = arith.subf %114, %113 : vector<1x16xf32>
    %116 = math.exp %115 : vector<1x16xf32>
    %cst_22 = arith.constant 1.000000e+00 : f32
    %117 = vector.broadcast %cst_22 : f32 to vector<1x16xf32>
    %118 = arith.addf %117, %116 : vector<1x16xf32>
    %119 = math.log %118 : vector<1x16xf32>
    %120 = arith.addf %112, %119 : vector<1x16xf32>
    %c0_23 = arith.constant 0 : index
    %c0_24 = arith.constant 0 : index
    %121 = vector.load %arg9[%c0_23, %c0_24] : memref<1x16xf32, #tpu.memory_space<vmem>>, vector<1x16xf32>
    tpu.vector_store %arg9[%c0_23, %c0_24], %120 {strides = array<i32>} : memref<1x16xf32, #tpu.memory_space<vmem>>, vector<1x16xf32>,
    return
  }
  func.func @transform_0(%arg0: i32) -> (i32, i32) {
    %c0_i32 = arith.constant 0 : i32
    %c0_i32_0 = arith.constant 0 : i32
    return %arg0, %c0_i32 : i32, i32
  }
  func.func @transform_1(%arg0: i32) -> (i32, i32) {
    %c0_i32 = arith.constant 0 : i32
    %c0_i32_0 = arith.constant 0 : i32
    return %arg0, %c0_i32 : i32, i32
  }
  func.func @transform_2(%arg0: i32) -> (i32, i32) {
    %c0_i32 = arith.constant 0 : i32
    %c0_i32_0 = arith.constant 0 : i32
    %c0_i32_1 = arith.constant 0 : i32
    return %c0_i32, %c0_i32_0 : i32, i32
  }
  func.func @transform_3(%arg0: i32) -> (i32, i32) {
    %c0_i32 = arith.constant 0 : i32
    %c0_i32_0 = arith.constant 0 : i32
    %c0_i32_1 = arith.constant 0 : i32
    return %c0_i32, %c0_i32_0 : i32, i32
  }
  func.func @transform_4(%arg0: i32) -> (i32, i32) {
    %c0_i32 = arith.constant 0 : i32
    %c0_i32_0 = arith.constant 0 : i32
    %c0_i32_1 = arith.constant 0 : i32
    return %c0_i32, %c0_i32_0 : i32, i32
  }
  func.func @transform_5(%arg0: i32) -> (i32, i32) {
    %c0_i32 = arith.constant 0 : i32
    %c0_i32_0 = arith.constant 0 : i32
    %c0_i32_1 = arith.constant 0 : i32
    return %c0_i32, %c0_i32_0 : i32, i32
  }
  func.func @transform_6(%arg0: i32) -> (i32, i32) {
    %c0_i32 = arith.constant 0 : i32
    %c0_i32_0 = arith.constant 0 : i32
    %c0_i32_1 = arith.constant 0 : i32
    return %c0_i32, %c0_i32_0 : i32, i32
  }
  func.func @transform_7(%arg0: i32) -> (i32, i32) {
    %c0_i32 = arith.constant 0 : i32
    %c0_i32_0 = arith.constant 0 : i32
    return %arg0, %c0_i32 : i32, i32
  }
  func.func @transform_8(%arg0: i32) -> (i32, i32) {
    %c0_i32 = arith.constant 0 : i32
    %c0_i32_0 = arith.constant 0 : i32
    return %arg0, %c0_i32 : i32, i32
  }
}

</mosaic_0001>

<llo_original>
// kernel: tpu_custom_call.1
$region0: #{tpu_custom_call.1}
  #allocation0 [shape = 'u32[]', space=smem, size = 0x4, offset = 0x4, fixed_abs, tag = 'smem constant byte address 0x4 - core index']
  #allocation1 [shape = 'u32[144,128]{1,0:T(1,128)}', space=vmem, size = 0x12000, scoped, tag = 'internal scratch']
  #allocation2 [shape = 'f32[1,1]{1,0:T(1,128)S(6)}', space=smem, size = 0x200, scoped, tag = 'scoped memory for tpu_custom_call.1']
  %s0 = inlined_call_operand.hbm [shape: s32[16,16], index: 0, kind: input, shape index: {}]
  %s1 = inlined_call_operand.vmem [shape: f32[1,16], index: 1, kind: input, shape index: {}]
  %s2 = inlined_call_operand.hbm [shape: bf16[128,128], index: 2, kind: input, shape index: {}]
  %s3 = inlined_call_operand.hbm [shape: bf16[128,128], index: 3, kind: input, shape index: {}]
  %s4 = inlined_call_operand.vmem [shape: f32[1,128], index: 4, kind: input, shape index: {}]
  %s5 = inlined_call_operand.vmem [shape: f32[1,128], index: 5, kind: input, shape index: {}]
  %s6 = inlined_call_operand.<no memory space> [shape: f32[1,1], index: 6, kind: input, shape index: {}]
  %s7 = inlined_call_operand.hbm [shape: f32[1,16], index: 7, kind: output, shape index: {0}]
  %s8 = inlined_call_operand.hbm [shape: f32[1,16], index: 8, kind: output, shape index: {1}]
  %9 = xla_tuple %s7, %s8
  %s10 = sld [smem:[#allocation0]]
  $region58: #{tpu_custom_call.1} parent=0
    _
  %s12 = ssub.s32 1, %s10
  %s13 = scalar_select 0, %s12, %s10
  %14 = sst [smem:[#allocation2]] %s6
  $region1: #{tpu_custom_call.1} parent=0
    #allocation3 [shape = 'u8[8192]{0}', space=vmem, size = 0x2000, scoped, tag = 'input window, operand 0, single buffered']
    #allocation4 [shape = 's32[1]{0}', space=sflag, size = 0x4, scoped, tag = 'scoped memory for tpu_custom_call.1']
    #allocation5 [shape = 's32[1]{0}', space=sflag, size = 0x4, scoped, tag = 'scoped memory for tpu_custom_call.1']
    #allocation6 [shape = 'u8[32768]{0}', space=vmem, size = 0x8000, scoped, tag = 'input window, operand 2, single buffered']
    #allocation7 [shape = 's32[1]{0}', space=sflag, size = 0x4, scoped, tag = 'scoped memory for tpu_custom_call.1']
    #allocation8 [shape = 'u8[32768]{0}', space=vmem, size = 0x8000, scoped, tag = 'input window, operand 3, single buffered']
    #allocation9 [shape = 'u8[512]{0}', space=vmem, size = 0x400, scoped, tag = 'output window, operand 0, single buffered']
    #allocation10 [shape = 'u8[512]{0}', space=vmem, size = 0x400, scoped, tag = 'output window, operand 1, single buffered']
    #allocation11 [shape = 's32[1]{0}', space=sflag, size = 0x4, scoped, tag = 'scoped memory for tpu_custom_call.1']
    %15 = vsyncpa [#allocation4], 0
    %16 = vsyncpa [#allocation7], 0
    %17 = vsyncpa [#allocation5], 0
    %18 = vsyncpa [#allocation11], 0
    // Predicated region
    $region2: #{tpu_custom_call.1} parent=1 // pred_check
      _
    $region3: #{tpu_custom_call.1} parent=1 // pred_check_branch
      %20 = sbr.rel (0) target = $region5
    $region4: #{tpu_custom_call.1} parent=1 // pred_region
      %s22 = ssub.s32 256, 256
      %23 = vsyncadd [#allocation4], %s22
      %s24 = sshll.u32 [#allocation3], 4
      %s25 = int_to_ptr.vmem [resolvable:$true] %s24
      %30 = dma.hbm_to_vmem [thread:$0]  %s0, 256, %s25, [#allocation4], 128, 128, 8
    $region5: #{tpu_custom_call.1} parent=1 // pred_fallthru
      _
    // Predicated region
    $region6: #{tpu_custom_call.1} parent=1 // pred_check
      _
    $region7: #{tpu_custom_call.1} parent=1 // pred_check_branch
      %32 = sbr.rel (0) target = $region9
    $region8: #{tpu_custom_call.1} parent=1 // pred_region
      _
    $region9: #{tpu_custom_call.1} parent=1 // pred_fallthru
      _
    // Predicated region
    $region10: #{tpu_custom_call.1} parent=1 // pred_check
      _
    $region11: #{tpu_custom_call.1} parent=1 // pred_check_branch
      %34 = sbr.rel (0) target = $region13
    $region12: #{tpu_custom_call.1} parent=1 // pred_region
      %s36 = ssub.s32 1024, 1024
      %37 = vsyncadd [#allocation7], %s36
      %s38 = sshll.u32 [#allocation6], 4
      %s39 = int_to_ptr.vmem [resolvable:$true] %s38
      %44 = dma.hbm_to_vmem [thread:$0]  %s2, 1024, %s39, [#allocation7], 64, 64, 4
    $region13: #{tpu_custom_call.1} parent=1 // pred_fallthru
      _
    // Predicated region
    $region14: #{tpu_custom_call.1} parent=1 // pred_check
      _
    $region15: #{tpu_custom_call.1} parent=1 // pred_check_branch
      %46 = sbr.rel (0) target = $region17
    $region16: #{tpu_custom_call.1} parent=1 // pred_region
      %s48 = ssub.s32 1024, 1024
      %49 = vsyncadd [#allocation7], %s48
      %s50 = sshll.u32 [#allocation8], 4
      %s51 = int_to_ptr.vmem [resolvable:$true] %s50
      %56 = dma.hbm_to_vmem [thread:$0]  %s3, 1024, %s51, [#allocation7], 64, 64, 4
    $region17: #{tpu_custom_call.1} parent=1 // pred_fallthru
      _
    // Predicated region
    $region18: #{tpu_custom_call.1} parent=1 // pred_check
      _
    $region19: #{tpu_custom_call.1} parent=1 // pred_check_branch
      %58 = sbr.rel (0) target = $region21
    $region20: #{tpu_custom_call.1} parent=1 // pred_region
      _
    $region21: #{tpu_custom_call.1} parent=1 // pred_fallthru
      _
    // Predicated region
    $region22: #{tpu_custom_call.1} parent=1 // pred_check
      _
    $region23: #{tpu_custom_call.1} parent=1 // pred_check_branch
      %60 = sbr.rel (0) target = $region25
    $region24: #{tpu_custom_call.1} parent=1 // pred_region
      _
    $region25: #{tpu_custom_call.1} parent=1 // pred_fallthru
      _
    // Predicated region
    $region26: #{tpu_custom_call.1} parent=1 // pred_check
      _
    $region27: #{tpu_custom_call.1} parent=1 // pred_check_branch
      %62 = sbr.rel (0) target = $region29
    $region28: #{tpu_custom_call.1} parent=1 // pred_region
      _
    $region29: #{tpu_custom_call.1} parent=1 // pred_fallthru
      _
    // Predicated region
    $region30: #{tpu_custom_call.1} parent=1 // pred_check
      _
    $region31: #{tpu_custom_call.1} parent=1 // pred_check_branch
      %64 = sbr.rel (0) target = $region33
    $region32: #{tpu_custom_call.1} parent=1 // pred_region
      %65 = dma.done [#allocation4], 256
    $region33: #{tpu_custom_call.1} parent=1 // pred_fallthru
      _
    // Predicated region
    $region34: #{tpu_custom_call.1} parent=1 // pred_check
      _
    $region35: #{tpu_custom_call.1} parent=1 // pred_check_branch
      %67 = sbr.rel (0) target = $region37
    $region36: #{tpu_custom_call.1} parent=1 // pred_region
      %68 = dma.done [#allocation7], 1024
    $region37: #{tpu_custom_call.1} parent=1 // pred_fallthru
      _
    // Predicated region
    $region38: #{tpu_custom_call.1} parent=1 // pred_check
      _
    $region39: #{tpu_custom_call.1} parent=1 // pred_check_branch
      %70 = sbr.rel (0) target = $region41
    $region40: #{tpu_custom_call.1} parent=1 // pred_region
      %71 = dma.done [#allocation7], 1024
    $region41: #{tpu_custom_call.1} parent=1 // pred_fallthru
      _
    %v73 = vld [vmem:[#allocation3] sm:$0xff]
    %v74 = vld [vmem:[#allocation3 + $0x8] sm:$0xff]
    %v75 = vlaneseq
    %v76 = vand.u32 %v75, 127
    %77 = vset.pattern.permute.xlu0 0
    %78 = vperm.xlu0 %77, %v73
    %v79 = vpop.permute.xlu0 %78
    %80 = vset.pattern.permute.xlu0 0
    %81 = vperm.xlu0 %80, %v74
    %v82 = vpop.permute.xlu0 %81
    %vm83 = vcmp.eq.s32.totalorder %v79, %v76
    %vm84 = vcmp.eq.s32.totalorder %v82, %v76
    %v85 = vsel %vm83, 1, 0
    %v86 = vsel %vm84, 1, 0
    %87 = vset.pattern.permute.xlu0 1
    %88 = vperm.xlu0 %87, %v73
    %v89 = vpop.permute.xlu0 %88
    %90 = vset.pattern.permute.xlu0 1
    %91 = vperm.xlu0 %90, %v74
    %v92 = vpop.permute.xlu0 %91
    %vm93 = vcmp.eq.s32.totalorder %v89, %v76
    %vm94 = vcmp.eq.s32.totalorder %v92, %v76
    %v95 = vsel %vm93, 1, 0
    %v96 = vsel %vm94, 1, 0
    %v97 = vadd.s32 %v85, %v95
    %v98 = vadd.s32 %v86, %v96
    %99 = vset.pattern.permute.xlu0 2
    %100 = vperm.xlu0 %99, %v73
    %v101 = vpop.permute.xlu0 %100
    %102 = vset.pattern.permute.xlu0 2
    %103 = vperm.xlu0 %102, %v74
    %v104 = vpop.permute.xlu0 %103
    %vm105 = vcmp.eq.s32.totalorder %v101, %v76
    %vm106 = vcmp.eq.s32.totalorder %v104, %v76
    %v107 = vsel %vm105, 1, 0
    %v108 = vsel %vm106, 1, 0
    %v109 = vadd.s32 %v97, %v107
    %v110 = vadd.s32 %v98, %v108
    %111 = vset.pattern.permute.xlu0 3
    %112 = vperm.xlu0 %111, %v73
    %v113 = vpop.permute.xlu0 %112
    %114 = vset.pattern.permute.xlu0 3
    %115 = vperm.xlu0 %114, %v74
    %v116 = vpop.permute.xlu0 %115
    %vm117 = vcmp.eq.s32.totalorder %v113, %v76
    %vm118 = vcmp.eq.s32.totalorder %v116, %v76
    %v119 = vsel %vm117, 1, 0
    %v120 = vsel %vm118, 1, 0
    %v121 = vadd.s32 %v109, %v119
    %v122 = vadd.s32 %v110, %v120
    %123 = vset.pattern.permute.xlu0 4
    %124 = vperm.xlu0 %123, %v73
    %v125 = vpop.permute.xlu0 %124
    %126 = vset.pattern.permute.xlu0 4
    %127 = vperm.xlu0 %126, %v74
    %v128 = vpop.permute.xlu0 %127
    %vm129 = vcmp.eq.s32.totalorder %v125, %v76
    %vm130 = vcmp.eq.s32.totalorder %v128, %v76
    %v131 = vsel %vm129, 1, 0
    %v132 = vsel %vm130, 1, 0
    %v133 = vadd.s32 %v121, %v131
    %v134 = vadd.s32 %v122, %v132
    %135 = vset.pattern.permute.xlu0 5
    %136 = vperm.xlu0 %135, %v73
    %v137 = vpop.permute.xlu0 %136
    %138 = vset.pattern.permute.xlu0 5
    %139 = vperm.xlu0 %138, %v74
    %v140 = vpop.permute.xlu0 %139
    %vm141 = vcmp.eq.s32.totalorder %v137, %v76
    %vm142 = vcmp.eq.s32.totalorder %v140, %v76
    %v143 = vsel %vm141, 1, 0
    %v144 = vsel %vm142, 1, 0
    %v145 = vadd.s32 %v133, %v143
    %v146 = vadd.s32 %v134, %v144
    %147 = vset.pattern.permute.xlu0 6
    %148 = vperm.xlu0 %147, %v73
    %v149 = vpop.permute.xlu0 %148
    %150 = vset.pattern.permute.xlu0 6
    %151 = vperm.xlu0 %150, %v74
    %v152 = vpop.permute.xlu0 %151
    %vm153 = vcmp.eq.s32.totalorder %v149, %v76
    %vm154 = vcmp.eq.s32.totalorder %v152, %v76
    %v155 = vsel %vm153, 1, 0
    %v156 = vsel %vm154, 1, 0
    %v157 = vadd.s32 %v145, %v155
    %v158 = vadd.s32 %v146, %v156
    %159 = vset.pattern.permute.xlu0 7
    %160 = vperm.xlu0 %159, %v73
    %v161 = vpop.permute.xlu0 %160
    %162 = vset.pattern.permute.xlu0 7
    %163 = vperm.xlu0 %162, %v74
    %v164 = vpop.permute.xlu0 %163
    %vm165 = vcmp.eq.s32.totalorder %v161, %v76
    %vm166 = vcmp.eq.s32.totalorder %v164, %v76
    %v167 = vsel %vm165, 1, 0
    %v168 = vsel %vm166, 1, 0
    %v169 = vadd.s32 %v157, %v167
    %v170 = vadd.s32 %v158, %v168
    %171 = vset.pattern.permute.xlu0 8
    %172 = vperm.xlu0 %171, %v73
    %v173 = vpop.permute.xlu0 %172
    %174 = vset.pattern.permute.xlu0 8
    %175 = vperm.xlu0 %174, %v74
    %v176 = vpop.permute.xlu0 %175
    %vm177 = vcmp.eq.s32.totalorder %v173, %v76
    %vm178 = vcmp.eq.s32.totalorder %v176, %v76
    %v179 = vsel %vm177, 1, 0
    %v180 = vsel %vm178, 1, 0
    %v181 = vadd.s32 %v169, %v179
    %v182 = vadd.s32 %v170, %v180
    %183 = vset.pattern.permute.xlu0 9
    %184 = vperm.xlu0 %183, %v73
    %v185 = vpop.permute.xlu0 %184
    %186 = vset.pattern.permute.xlu0 9
    %187 = vperm.xlu0 %186, %v74
    %v188 = vpop.permute.xlu0 %187
    %vm189 = vcmp.eq.s32.totalorder %v185, %v76
    %vm190 = vcmp.eq.s32.totalorder %v188, %v76
    %v191 = vsel %vm189, 1, 0
    %v192 = vsel %vm190, 1, 0
    %v193 = vadd.s32 %v181, %v191
    %v194 = vadd.s32 %v182, %v192
    %195 = vset.pattern.permute.xlu0 10
    %196 = vperm.xlu0 %195, %v73
    %v197 = vpop.permute.xlu0 %196
    %198 = vset.pattern.permute.xlu0 10
    %199 = vperm.xlu0 %198, %v74
    %v200 = vpop.permute.xlu0 %199
    %vm201 = vcmp.eq.s32.totalorder %v197, %v76
    %vm202 = vcmp.eq.s32.totalorder %v200, %v76
    %v203 = vsel %vm201, 1, 0
    %v204 = vsel %vm202, 1, 0
    %v205 = vadd.s32 %v193, %v203
    %v206 = vadd.s32 %v194, %v204
    %207 = vset.pattern.permute.xlu0 11
    %208 = vperm.xlu0 %207, %v73
    %v209 = vpop.permute.xlu0 %208
    %210 = vset.pattern.permute.xlu0 11
    %211 = vperm.xlu0 %210, %v74
    %v212 = vpop.permute.xlu0 %211
    %vm213 = vcmp.eq.s32.totalorder %v209, %v76
    %vm214 = vcmp.eq.s32.totalorder %v212, %v76
    %v215 = vsel %vm213, 1, 0
    %v216 = vsel %vm214, 1, 0
    %v217 = vadd.s32 %v205, %v215
    %v218 = vadd.s32 %v206, %v216
    %219 = vset.pattern.permute.xlu0 12
    %220 = vperm.xlu0 %219, %v73
    %v221 = vpop.permute.xlu0 %220
    %222 = vset.pattern.permute.xlu0 12
    %223 = vperm.xlu0 %222, %v74
    %v224 = vpop.permute.xlu0 %223
    %vm225 = vcmp.eq.s32.totalorder %v221, %v76
    %vm226 = vcmp.eq.s32.totalorder %v224, %v76
    %v227 = vsel %vm225, 1, 0
    %v228 = vsel %vm226, 1, 0
    %v229 = vadd.s32 %v217, %v227
    %v230 = vadd.s32 %v218, %v228
    %231 = vset.pattern.permute.xlu0 13
    %232 = vperm.xlu0 %231, %v73
    %v233 = vpop.permute.xlu0 %232
    %234 = vset.pattern.permute.xlu0 13
    %235 = vperm.xlu0 %234, %v74
    %v236 = vpop.permute.xlu0 %235
    %vm237 = vcmp.eq.s32.totalorder %v233, %v76
    %vm238 = vcmp.eq.s32.totalorder %v236, %v76
    %v239 = vsel %vm237, 1, 0
    %v240 = vsel %vm238, 1, 0
    %v241 = vadd.s32 %v229, %v239
    %v242 = vadd.s32 %v230, %v240
    %243 = vset.pattern.permute.xlu0 14
    %244 = vperm.xlu0 %243, %v73
    %v245 = vpop.permute.xlu0 %244
    %246 = vset.pattern.permute.xlu0 14
    %247 = vperm.xlu0 %246, %v74
    %v248 = vpop.permute.xlu0 %247
    %vm249 = vcmp.eq.s32.totalorder %v245, %v76
    %vm250 = vcmp.eq.s32.totalorder %v248, %v76
    %v251 = vsel %vm249, 1, 0
    %v252 = vsel %vm250, 1, 0
    %v253 = vadd.s32 %v241, %v251
    %v254 = vadd.s32 %v242, %v252
    %255 = vset.pattern.permute.xlu0 15
    %256 = vperm.xlu0 %255, %v73
    %v257 = vpop.permute.xlu0 %256
    %258 = vset.pattern.permute.xlu0 15
    %259 = vperm.xlu0 %258, %v74
    %v260 = vpop.permute.xlu0 %259
    %vm261 = vcmp.eq.s32.totalorder %v257, %v76
    %vm262 = vcmp.eq.s32.totalorder %v260, %v76
    %v263 = vsel %vm261, 1, 0
    %v264 = vsel %vm262, 1, 0
    %v265 = vadd.s32 %v253, %v263
    %v266 = vadd.s32 %v254, %v264
    %v267 = vcvt.s32.f32 %v265
    %v268 = vcvt.s32.f32 %v266
    %v269 = vpack.c.bf16 %v268, %v267
    %v270 = vld [vmem:[#allocation6] sm:$0xf]
    %v271 = vld [vmem:[#allocation6 + $0x4] sm:$0xf]
    %v272 = vld [vmem:[#allocation6 + $0x8] sm:$0xf]
    %v273 = vld [vmem:[#allocation6 + $0xc] sm:$0xf]
    %v274 = vld [vmem:[#allocation6 + $0x10] sm:$0xf]
    %v275 = vld [vmem:[#allocation6 + $0x14] sm:$0xf]
    %v276 = vld [vmem:[#allocation6 + $0x18] sm:$0xf]
    %v277 = vld [vmem:[#allocation6 + $0x1c] sm:$0xf]
    %v278 = vld [vmem:[#allocation6 + $0x20] sm:$0xf]
    %v279 = vld [vmem:[#allocation6 + $0x24] sm:$0xf]
    %v280 = vld [vmem:[#allocation6 + $0x28] sm:$0xf]
    %v281 = vld [vmem:[#allocation6 + $0x2c] sm:$0xf]
    %v282 = vld [vmem:[#allocation6 + $0x30] sm:$0xf]
    %v283 = vld [vmem:[#allocation6 + $0x34] sm:$0xf]
    %v284 = vld [vmem:[#allocation6 + $0x38] sm:$0xf]
    %v285 = vld [vmem:[#allocation6 + $0x3c] sm:$0xf]
    %v302 = vunpack.c.l.b16 %v270
    %v303 = vunpack.c.l.b16 %v271
    %v304 = vunpack.c.l.b16 %v272
    %v305 = vunpack.c.l.b16 %v273
    %v306 = vunpack.c.l.b16 %v274
    %v307 = vunpack.c.l.b16 %v275
    %v308 = vunpack.c.l.b16 %v276
    %v309 = vunpack.c.l.b16 %v277
    %v310 = vunpack.c.l.b16 %v278
    %v311 = vunpack.c.l.b16 %v279
    %v312 = vunpack.c.l.b16 %v280
    %v313 = vunpack.c.l.b16 %v281
    %v314 = vunpack.c.l.b16 %v282
    %v315 = vunpack.c.l.b16 %v283
    %v316 = vunpack.c.l.b16 %v284
    %v317 = vunpack.c.l.b16 %v285
    %v318 = vpack.c.b16 %v303, %v302
    %v319 = vpack.c.b16 %v305, %v304
    %v320 = vpack.c.b16 %v307, %v306
    %v321 = vpack.c.b16 %v309, %v308
    %v322 = vpack.c.b16 %v311, %v310
    %v323 = vpack.c.b16 %v313, %v312
    %v324 = vpack.c.b16 %v315, %v314
    %v325 = vpack.c.b16 %v317, %v316
    %334 = vmatprep.subr.bf16.mxu0 0
    %335 = vmatpush1.bf16.msra.mxu0 %v318
    %336 = vmatprep.subr.bf16.mxu0 0
    %337 = vmatpush1.bf16.msra.mxu0 %v319
    %338 = vmatprep.subr.bf16.mxu0 0
    %339 = vmatpush1.bf16.msra.mxu0 %v320
    %340 = vmatprep.subr.bf16.mxu0 0
    %341 = vmatpush1.bf16.msra.mxu0 %v321
    %342 = vmatprep.subr.bf16.mxu0 0
    %343 = vmatpush1.bf16.msra.mxu0 %v322
    %344 = vmatprep.subr.bf16.mxu0 0
    %345 = vmatpush1.bf16.msra.mxu0 %v323
    %346 = vmatprep.subr.bf16.mxu0 0
    %347 = vmatpush1.bf16.msra.mxu0 %v324
    %348 = vmatprep.subr.bf16.mxu0 0
    %349 = vmatpush1.bf16.msra.mxu0 %v325
    %350 = vmatprep.subr.bf16.mxu0 0
    %351 = vmatpush1.bf16.msra.mxu0 0
    %352 = vmatprep.subr.bf16.mxu0 0
    %353 = vmatpush1.bf16.msra.mxu0 0
    %354 = vmatprep.subr.bf16.mxu0 0
    %355 = vmatpush1.bf16.msra.mxu0 0
    %356 = vmatprep.subr.bf16.mxu0 0
    %357 = vmatpush1.bf16.msra.mxu0 0
    %358 = vmatprep.subr.bf16.mxu0 0
    %359 = vmatpush1.bf16.msra.mxu0 0
    %360 = vmatprep.subr.bf16.mxu0 0
    %361 = vmatpush1.bf16.msra.mxu0 0
    %362 = vmatprep.subr.bf16.mxu0 0
    %363 = vmatpush1.bf16.msra.mxu0 0
    %364 = vmatprep.subr.bf16.mxu0 0
    %365 = vmatpush1.bf16.msra.mxu0 0
    %366 = vmatprep.mubr.bf16.mxu0 0
    %367 = vmatmul.mubr.bf16.gmra.mrb[0].mxu0 %v269
    %v368 = vpop.f32.mrb[0].mxu0
    %v369 = vadd.f32 0.0, %v368
    %v370 = vpop.f32.mrb[0].mxu0
    %v371 = vpop.f32.mrb[0].mxu0
    %v372 = vadd.f32 0.0, %v371
    %v373 = vpop.f32.mrb[0].mxu0
    %374 = vdwg.mxu0
    %v375 = vmul.f32 %v369, 0.0625
    %v376 = vmul.f32 %v372, 0.0625
    %v377 = vpack.c.bf16 %v376, %v375
    %v378 = vld [vmem:[#allocation8] sm:$0xf]
    %v379 = vld [vmem:[#allocation8 + $0x4] sm:$0xf]
    %v380 = vld [vmem:[#allocation8 + $0x8] sm:$0xf]
    %v381 = vld [vmem:[#allocation8 + $0xc] sm:$0xf]
    %v382 = vld [vmem:[#allocation8 + $0x10] sm:$0xf]
    %v383 = vld [vmem:[#allocation8 + $0x14] sm:$0xf]
    %v384 = vld [vmem:[#allocation8 + $0x18] sm:$0xf]
    %v385 = vld [vmem:[#allocation8 + $0x1c] sm:$0xf]
    %v386 = vld [vmem:[#allocation8 + $0x20] sm:$0xf]
    %v387 = vld [vmem:[#allocation8 + $0x24] sm:$0xf]
    %v388 = vld [vmem:[#allocation8 + $0x28] sm:$0xf]
    %v389 = vld [vmem:[#allocation8 + $0x2c] sm:$0xf]
    %v390 = vld [vmem:[#allocation8 + $0x30] sm:$0xf]
    %v391 = vld [vmem:[#allocation8 + $0x34] sm:$0xf]
    %v392 = vld [vmem:[#allocation8 + $0x38] sm:$0xf]
    %v393 = vld [vmem:[#allocation8 + $0x3c] sm:$0xf]
    %v394 = vld [vmem:[%s4] sm:$0x1]
    %v396 = vlaneseq
    %v397 = vshrl.u32 %v396, 7
    %v398 = vsub.s32 0, %v397
    %v399 = vrot.slane %v394, %v398
    %v417 = vunpack.c.l.b16 %v378
    %v418 = vunpack.c.l.b16 %v379
    %v419 = vunpack.c.l.b16 %v380
    %v420 = vunpack.c.l.b16 %v381
    %v421 = vunpack.c.l.b16 %v382
    %v422 = vunpack.c.l.b16 %v383
    %v423 = vunpack.c.l.b16 %v384
    %v424 = vunpack.c.l.b16 %v385
    %v425 = vunpack.c.l.b16 %v386
    %v426 = vunpack.c.l.b16 %v387
    %v427 = vunpack.c.l.b16 %v388
    %v428 = vunpack.c.l.b16 %v389
    %v429 = vunpack.c.l.b16 %v390
    %v430 = vunpack.c.l.b16 %v391
    %v431 = vunpack.c.l.b16 %v392
    %v432 = vunpack.c.l.b16 %v393
    %v433 = vpack.c.b16 %v418, %v417
    %v434 = vpack.c.b16 %v420, %v419
    %v435 = vpack.c.b16 %v422, %v421
    %v436 = vpack.c.b16 %v424, %v423
    %v437 = vpack.c.b16 %v426, %v425
    %v438 = vpack.c.b16 %v428, %v427
    %v439 = vpack.c.b16 %v430, %v429
    %v440 = vpack.c.b16 %v432, %v431
    %449 = vmatprep.subr.bf16.mxu0 0
    %450 = vmatpush1.bf16.msra.mxu0 %v433
    %451 = vmatprep.subr.bf16.mxu0 0
    %452 = vmatpush1.bf16.msra.mxu0 %v434
    %453 = vmatprep.subr.bf16.mxu0 0
    %454 = vmatpush1.bf16.msra.mxu0 %v435
    %455 = vmatprep.subr.bf16.mxu0 0
    %456 = vmatpush1.bf16.msra.mxu0 %v436
    %457 = vmatprep.subr.bf16.mxu0 0
    %458 = vmatpush1.bf16.msra.mxu0 %v437
    %459 = vmatprep.subr.bf16.mxu0 0
    %460 = vmatpush1.bf16.msra.mxu0 %v438
    %461 = vmatprep.subr.bf16.mxu0 0
    %462 = vmatpush1.bf16.msra.mxu0 %v439
    %463 = vmatprep.subr.bf16.mxu0 0
    %464 = vmatpush1.bf16.msra.mxu0 %v440
    %465 = vmatprep.subr.bf16.mxu0 0
    %466 = vmatpush1.bf16.msra.mxu0 0
    %467 = vmatprep.subr.bf16.mxu0 0
    %468 = vmatpush1.bf16.msra.mxu0 0
    %469 = vmatprep.subr.bf16.mxu0 0
    %470 = vmatpush1.bf16.msra.mxu0 0
    %471 = vmatprep.subr.bf16.mxu0 0
    %472 = vmatpush1.bf16.msra.mxu0 0
    %473 = vmatprep.subr.bf16.mxu0 0
    %474 = vmatpush1.bf16.msra.mxu0 0
    %475 = vmatprep.subr.bf16.mxu0 0
    %476 = vmatpush1.bf16.msra.mxu0 0
    %477 = vmatprep.subr.bf16.mxu0 0
    %478 = vmatpush1.bf16.msra.mxu0 0
    %479 = vmatprep.subr.bf16.mxu0 0
    %480 = vmatpush1.bf16.msra.mxu0 0
    %481 = vmatprep.mubr.bf16.mxu0 0
    %482 = vmatmul.mubr.bf16.gmra.mrb[0].mxu0 %v377
    %v483 = vpop.f32.mrb[0].mxu0
    %v484 = vadd.f32 %v399, %v483
    %v485 = vpop.f32.mrb[0].mxu0
    %v486 = vpop.f32.mrb[0].mxu0
    %v487 = vadd.f32 %v399, %v486
    %v488 = vpop.f32.mrb[0].mxu0
    %489 = vdwg.mxu0
    %v490 = vtanh.pop %v484
    %v491 = vtanh.pop %v487
    %v492 = vld [vmem:[%s5] sm:$0x1]
    %s493 = sld [smem:[#allocation2]]
    %v494 = vstv %s493
    %495 = vmatprep.subr.mxu0 0.0
    %496 = vmatpush1.xpose.msra.mxu0 %v490
    %497 = vmatprep.subr.mxu0 0.0
    %498 = vmatpush1.xpose.msra.mxu0 %v491
    %499 = vmatprep.subr.mxu0 0.0
    %500 = vmatpush1.xpose.msra.mxu0 0.0
    %501 = vmatprep.subr.mxu0 0.0
    %502 = vmatpush1.xpose.msra.mxu0 0.0
    %503 = vmatprep.subr.mxu0 0.0
    %504 = vmatpush1.xpose.msra.mxu0 0.0
    %505 = vmatprep.subr.mxu0 0.0
    %506 = vmatpush1.xpose.msra.mxu0 0.0
    %507 = vmatprep.subr.mxu0 0.0
    %508 = vmatpush1.xpose.msra.mxu0 0.0
    %509 = vmatprep.subr.mxu0 0.0
    %510 = vmatpush1.xpose.msra.mxu0 0.0
    %511 = vmatprep.subr.mxu0 0.0
    %512 = vmatpush1.xpose.msra.mxu0 0.0
    %513 = vmatprep.subr.mxu0 0.0
    %514 = vmatpush1.xpose.msra.mxu0 0.0
    %515 = vmatprep.subr.mxu0 0.0
    %516 = vmatpush1.xpose.msra.mxu0 0.0
    %517 = vmatprep.subr.mxu0 0.0
    %518 = vmatpush1.xpose.msra.mxu0 0.0
    %519 = vmatprep.subr.mxu0 0.0
    %520 = vmatpush1.xpose.msra.mxu0 0.0
    %521 = vmatprep.subr.mxu0 0.0
    %522 = vmatpush1.xpose.msra.mxu0 0.0
    %523 = vmatprep.subr.mxu0 0.0
    %524 = vmatpush1.xpose.msra.mxu0 0.0
    %525 = vmatprep.subr.mxu0 0.0
    %526 = vmatpush1.xpose.msra.mxu0 0.0
    %527 = vmatprep.subr.mxu0 0.0
    %528 = vmatpush1.xpose.msra.mxu0 0.0
    %529 = vmatprep.subr.mxu0 0.0
    %530 = vmatpush1.xpose.msra.mxu0 0.0
    %531 = vmatprep.subr.mxu0 0.0
    %532 = vmatpush1.xpose.msra.mxu0 0.0
    %533 = vmatprep.subr.mxu0 0.0
    %534 = vmatpush1.xpose.msra.mxu0 0.0
    %535 = vmatprep.subr.mxu0 0.0
    %536 = vmatpush1.xpose.msra.mxu0 0.0
    %537 = vmatprep.subr.mxu0 0.0
    %538 = vmatpush1.xpose.msra.mxu0 0.0
    %539 = vmatprep.subr.mxu0 0.0
    %540 = vmatpush1.xpose.msra.mxu0 0.0
    %541 = vmatprep.subr.mxu0 0.0
    %542 = vmatpush1.xpose.msra.mxu0 0.0
    %543 = vmatprep.subr.mxu0 0.0
    %544 = vmatpush1.xpose.msra.mxu0 0.0
    %545 = vmatprep.subr.mxu0 0.0
    %546 = vmatpush1.xpose.msra.mxu0 0.0
    %547 = vmatprep.subr.mxu0 0.0
    %548 = vmatpush1.xpose.msra.mxu0 0.0
    %549 = vmatprep.subr.mxu0 0.0
    %550 = vmatpush1.xpose.msra.mxu0 0.0
    %551 = vmatprep.subr.mxu0 0.0
    %552 = vmatpush1.xpose.msra.mxu0 0.0
    %553 = vmatprep.subr.mxu0 0.0
    %554 = vmatpush1.xpose.msra.mxu0 0.0
    %555 = vmatprep.subr.mxu0 0.0
    %556 = vmatpush1.xpose.msra.mxu0 0.0
    %557 = vmatprep.subr.mxu0 0.0
    %558 = vmatpush1.xpose.msra.mxu0 0.0
    %559 = vmatprep.mubr.f32.mxu0 0.0
    %560 = vmatmul.mubr.f32.gmra.mrb[0].mxu0 %v492
    %v561 = vpop.f32.mrb[0].mxu0
    %v562 = vadd.f32 %v494, %v561
    %v563 = vpop.f32.mrb[0].mxu0
    %564 = vdwg.mxu0
    %v565 = vsub.f32 0.0, %v562
    %v566 = vmul.f32 %v565, 1.442695
    %v567 = vpow.pop %v566
    %v568 = vadd.f32 %v567, 1.0
    %v569 = vrcp.pop %v568
    %vm570 = vcmask 122880
    %571 = vst.msk [vmem:[#allocation9] sm:$0x1] %vm570, %v569
    %v572 = vld [vmem:[%s1] sm:$0x1]
    %v573 = vmax.f32 %v562, 0.0
    %v574 = vmul.f32 %v572, %v562
    %v575 = vsub.f32 %v573, %v574
    %v576 = vand.u32 2147483647, %v562
    %v577 = vsub.f32 0.0, %v576
    %v578 = vmul.f32 %v577, 1.442695
    %v579 = vpow.pop %v578
    %v580 = vadd.f32 %v579, 1.0
    %v581 = vlog2.pop %v580
    %v582 = vmul.f32 %v581, 0.6931472
    %v583 = vadd.f32 %v575, %v582
    %584 = vst.msk [vmem:[#allocation10] sm:$0x1] %vm570, %v583
    // Predicated region
    $region42: #{tpu_custom_call.1} parent=1 // pred_check
      _
    $region43: #{tpu_custom_call.1} parent=1 // pred_check_branch
      %586 = sbr.rel (0) target = $region45
    $region44: #{tpu_custom_call.1} parent=1 // pred_region
      %s588 = ssub.s32 16, 16
      %589 = vsyncadd [#allocation5], %s588
      %s591 = sshll.u32 [#allocation9], 4
      %s592 = int_to_ptr.vmem [resolvable:$true] %s591
      %594 = dma.vmem_to_hbm [thread:$0]  %s592, 16, %s7, [#allocation5]
    $region45: #{tpu_custom_call.1} parent=1 // pred_fallthru
      _
    // Predicated region
    $region46: #{tpu_custom_call.1} parent=1 // pred_check
      _
    $region47: #{tpu_custom_call.1} parent=1 // pred_check_branch
      %596 = sbr.rel (0) target = $region49
    $region48: #{tpu_custom_call.1} parent=1 // pred_region
      %s598 = ssub.s32 16, 16
      %599 = vsyncadd [#allocation11], %s598
      %s601 = sshll.u32 [#allocation10], 4
      %s602 = int_to_ptr.vmem [resolvable:$true] %s601
      %604 = dma.vmem_to_hbm [thread:$0]  %s602, 16, %s8, [#allocation11]
    $region49: #{tpu_custom_call.1} parent=1 // pred_fallthru
      _
    // Predicated region
    $region50: #{tpu_custom_call.1} parent=1 // pred_check
      _
    $region51: #{tpu_custom_call.1} parent=1 // pred_check_branch
      %606 = sbr.rel (0) target = $region53
    $region52: #{tpu_custom_call.1} parent=1 // pred_region
      %607 = dma.done [#allocation5], 16
    $region53: #{tpu_custom_call.1} parent=1 // pred_fallthru
      _
    // Predicated region
    $region54: #{tpu_custom_call.1} parent=1 // pred_check
      _
    $region55: #{tpu_custom_call.1} parent=1 // pred_check_branch
      %609 = sbr.rel (0) target = $region57
    $region56: #{tpu_custom_call.1} parent=1 // pred_region
      %610 = dma.done [#allocation11], 16
    $region57: #{tpu_custom_call.1} parent=1 // pred_fallthru
      _
    %611 = vsyncpa [#allocation4], 1
    %612 = vsyncpa [#allocation7], 1
    %613 = vsyncpa [#allocation5], 1
    %614 = vsyncpa [#allocation11], 1

</llo_original>
